<compile_context>
chip_gen: v7x
topology: tpu7x:2x2x1
jax: 0.10.0
libtpu: 0.0.40
codegen_flags: <defaults>
</compile_context>

<pallas_src>
import jax
import jax.numpy as jnp
import numpy as np
from jax.experimental import pallas as pl
from jax.experimental.pallas import tpu as pltpu

EPS = 1e-6
_VMEM_DATA_BUDGET = 16 * 1024 * 1024   # bytes for the double-buffered in + out blocks
_VMEM_LIMIT_BYTES = 32 * 1024 * 1024   # scoped VMEM limit (safe on v5e / v6e / v7x)


def _layernorm_kernel(w_ref, b_ref, x_ref, o_ref):
    # w_ref, b_ref: SMEM (N,) scalar-prefetch refs (indexed by the batch grid axis)
    # x_ref, o_ref: VMEM (1, C, T) tiles for batch n, spatial tile t (T multiple of 128)
    n = pl.program_id(0)
    x = x_ref[...].astype(jnp.float32)                        # (1, C, T)
    u = jnp.mean(x, axis=1, keepdims=True)                    # (1, 1, T)
    d = x - u
    s = jnp.mean(d * d, axis=1, keepdims=True)                # biased variance (torch .mean)
    inv = jax.lax.rsqrt(s + EPS)                              # EUP rsqrt; no VPU divide
    w = w_ref[n]                                              # scalar: broadcasts over dim 0 == n
    b = b_ref[n]
    o_ref[...] = (d * (inv * w) + b).astype(o_ref.dtype)      # one unmasked full-block store


def _pick_spatial_tile(C, HW, itemsize):
    """Largest lane-dense tile T (multiple of 128, exactly dividing HW) within the VMEM budget."""
    if HW % 128 != 0:
        return HW                       # fall back: full spatial extent as a single block
    t_max = (_VMEM_DATA_BUDGET // (4 * C * itemsize)) // 128 * 128
    t_max = max(128, min(t_max, HW))
    for t in range(t_max, 127, -128):   # exact divisor -> no partial blocks, no masked stores
        if HW % t == 0:
            return t
    return 128


def layernorm_channels_first(x, weight, bias):
    """x: (N, C, H, W); weight, bias: (normalized_shape,) with normalized_shape == N."""
    N, C, H, W = x.shape
    if weight.shape != (N,) or bias.shape != (N,):
        raise ValueError(
            "weight.reshape(-1,1,1,1) broadcasts over dim 0 of x; the module is only "
            f"well-defined when normalized_shape == N (= {N}); got {weight.shape}/{bias.shape}")

    HW = H * W
    T = _pick_spatial_tile(C, HW, jnp.dtype(x.dtype).itemsize)
    x_flat = x.reshape(N, C, HW)        # layout-preserving reshape (free, outside the kernel)

    grid_spec = pltpu.PrefetchScalarGridSpec(
        num_scalar_prefetch=2,          # weight, bias -> SMEM
        grid=(N, HW // T),
        in_specs=[
            pl.BlockSpec((1, C, T), lambda n, t, w, b: (n, 0, t)),
        ],
        out_specs=pl.BlockSpec((1, C, T), lambda n, t, w, b: (n, 0, t)),
    )
    y_flat = pl.pallas_call(
        _layernorm_kernel,
        out_shape=jax.ShapeDtypeStruct((N, C, HW), x.dtype),
        grid_spec=grid_spec,
        compiler_params=pltpu.CompilerParams(
            dimension_semantics=("parallel", "parallel"),
            vmem_limit_bytes=_VMEM_LIMIT_BYTES,
        ),
    )(weight, bias, x_flat)
    return y_flat.reshape(N, C, H, W)


def layernorm_reference(x, weight, bias):
    """Pure-JAX transcription of the PyTorch forward, for verification."""
    u = jnp.mean(x, axis=1, keepdims=True)
    s = jnp.mean((x - u) ** 2, axis=1, keepdims=True)
    xn = (x - u) / jnp.sqrt(s + EPS)
    return weight.reshape(-1, 1, 1, 1) * xn + bias.reshape(-1, 1, 1, 1)


if __name__ == "__main__":
    # Small shapes consistent with the module: normalized_shape == N (see note above).
    N, C, H, W = 4, 4, 16, 16
    normalized_shape = 4

    key = jax.random.PRNGKey(0)
    x = jax.random.normal(key, (N, C, H, W), dtype=jnp.float32)

    # Deterministic parameter init (__init__ uses ones/zeros; perturb deterministically
    # so the affine path is actually exercised).
    weight = jnp.ones((normalized_shape,), jnp.float32) + 0.1 * jnp.arange(
        normalized_shape, dtype=jnp.float32)
    bias = 0.05 * jnp.arange(normalized_shape, dtype=jnp.float32)

    y = layernorm_channels_first(x, weight, bias)
    y = jax.block_until_ready(y)

    y_ref = layernorm_reference(x, weight, bias)
    np.testing.assert_allclose(np.asarray(y), np.asarray(y_ref), rtol=1e-5, atol=1e-5)

    print("KERNEL_OK")
</pallas_src>

<mosaic_0001>
module attributes {stable_mosaic.version = 11 : i64} {
  func.func @_layernorm_kernel(%arg0: i32, %arg1: i32, %arg2: memref<4xf32, #tpu.memory_space<smem>>, %arg3: memref<4xf32, #tpu.memory_space<smem>>, %arg4: memref<1x4x256xf32, #tpu.memory_space<vmem>>, %arg5: memref<1x4x256xf32, #tpu.memory_space<vmem>>) attributes {dimension_semantics = [#tpu.dimension_semantics<parallel>, #tpu.dimension_semantics<parallel>], iteration_bounds = array<i64: 4, 1>, scalar_prefetch = 2 : i64, scratch_operands = 0 : i64, tpu.core_type = #tpu.core_type<tc>, window_params = [{transform_indices = @transform_0, window_bounds = array<i64: 1, 4, 256>}, {transform_indices = @transform_1, window_bounds = array<i64: 1, 4, 256>}]} {
    %c0 = arith.constant 0 : index
    %c0_0 = arith.constant 0 : index
    %c0_1 = arith.constant 0 : index
    %0 = vector.load %arg4[%c0, %c0_0, %c0_1] : memref<1x4x256xf32, #tpu.memory_space<vmem>>, vector<1x4x256xf32>
    %cst = arith.constant dense<0.000000e+00> : vector<1x256xf32>
    %1 = vector.multi_reduction <add>, %0, %cst [1] : vector<1x4x256xf32> to vector<1x256xf32>
    %2 = vector.shape_cast %1 : vector<1x256xf32> to vector<1x1x256xf32>
    %cst_2 = arith.constant 4.000000e+00 : f32
    %3 = vector.broadcast %cst_2 : f32 to vector<1x1x256xf32>
    %4 = arith.divf %2, %3 : vector<1x1x256xf32>
    %5 = vector.broadcast %4 : vector<1x1x256xf32> to vector<1x4x256xf32>
    %6 = arith.subf %0, %5 : vector<1x4x256xf32>
    %7 = arith.mulf %6, %6 : vector<1x4x256xf32>
    %cst_3 = arith.constant dense<0.000000e+00> : vector<1x256xf32>
    %8 = vector.multi_reduction <add>, %7, %cst_3 [1] : vector<1x4x256xf32> to vector<1x256xf32>
    %9 = vector.shape_cast %8 : vector<1x256xf32> to vector<1x1x256xf32>
    %cst_4 = arith.constant 4.000000e+00 : f32
    %10 = vector.broadcast %cst_4 : f32 to vector<1x1x256xf32>
    %11 = arith.divf %9, %10 : vector<1x1x256xf32>
    %cst_5 = arith.constant 9.99999997E-7 : f32
    %12 = vector.broadcast %cst_5 : f32 to vector<1x1x256xf32>
    %13 = arith.addf %11, %12 : vector<1x1x256xf32>
    %14 = math.rsqrt %13 : vector<1x1x256xf32>
    %15 = arith.index_cast %arg0 : i32 to index
    %16 = memref.load %arg2[%15] : memref<4xf32, #tpu.memory_space<smem>>
    %17 = arith.index_cast %arg0 : i32 to index
    %18 = memref.load %arg3[%17] : memref<4xf32, #tpu.memory_space<smem>>
    %19 = vector.broadcast %16 : f32 to vector<1x1x256xf32>
    %20 = arith.mulf %14, %19 : vector<1x1x256xf32>
    %21 = vector.broadcast %20 : vector<1x1x256xf32> to vector<1x4x256xf32>
    %22 = arith.mulf %6, %21 : vector<1x4x256xf32>
    %23 = vector.broadcast %18 : f32 to vector<1x4x256xf32>
    %24 = arith.addf %22, %23 : vector<1x4x256xf32>
    %c0_6 = arith.constant 0 : index
    %c0_7 = arith.constant 0 : index
    %c0_8 = arith.constant 0 : index
    %25 = vector.load %arg5[%c0_6, %c0_7, %c0_8] : memref<1x4x256xf32, #tpu.memory_space<vmem>>, vector<1x4x256xf32>
    tpu.vector_store %arg5[%c0_6, %c0_7, %c0_8], %24 {strides = array<i32>} : memref<1x4x256xf32, #tpu.memory_space<vmem>>, vector<1x4x256xf32>,
    return
  }
  func.func @transform_0(%arg0: i32, %arg1: i32, %arg2: memref<4xf32, #tpu.memory_space<smem>>, %arg3: memref<4xf32, #tpu.memory_space<smem>>) -> (i32, i32, i32) {
    %c0_i32 = arith.constant 0 : i32
    %c0_i32_0 = arith.constant 0 : i32
    return %arg0, %c0_i32, %arg1 : i32, i32, i32
  }
  func.func @transform_1(%arg0: i32, %arg1: i32, %arg2: memref<4xf32, #tpu.memory_space<smem>>, %arg3: memref<4xf32, #tpu.memory_space<smem>>) -> (i32, i32, i32) {
    %c0_i32 = arith.constant 0 : i32
    %c0_i32_0 = arith.constant 0 : i32
    return %arg0, %c0_i32, %arg1 : i32, i32, i32
  }
}

</mosaic_0001>

<llo_original>
// kernel: tpu_custom_call.1
$region0: #{tpu_custom_call.1}
  #allocation0 [shape = 'u32[]', space=smem, size = 0x4, offset = 0x4, fixed_abs, tag = 'smem constant byte address 0x4 - core index']
  #allocation1 [shape = 'u32[144,128]{1,0:T(1,128)}', space=vmem, size = 0x12000, scoped, tag = 'internal scratch']
  #allocation2 [shape = 's32[1]{0}', space=sflag, size = 0x4, scoped, tag = 'scoped memory for tpu_custom_call.1']
  #allocation3 [shape = 'u8[512]{0}', space=smem, size = 0x200, scoped, tag = 'prefetched SMEM operand 0']
  #allocation4 [shape = 'u8[512]{0}', space=smem, size = 0x200, scoped, tag = 'prefetched SMEM operand 1']
  %s0 = inlined_call_operand.hbm [shape: f32[4], index: 0, kind: input, shape index: {}]
  %s1 = inlined_call_operand.vmem [shape: f32[4], index: 1, kind: input, shape index: {}]
  %s2 = inlined_call_operand.hbm [shape: f32[4,4,256], index: 2, kind: input, shape index: {}]
  %s3 = inlined_call_operand.hbm [shape: f32[4,4,256], index: 3, kind: output, shape index: {}]
  %s4 = sld [smem:[#allocation0]]
  $region41: #{tpu_custom_call.1} parent=0
    _
  %s6 = ssub.s32 1, %s4
  %s7 = scalar_select 0, %s6, %s4
  %9 = dma.hbm_to_smem %s0, 16, [#allocation3], [#allocation2]
  %s10 = sshll.u32 %s1, 4
  %s11 = int_to_ptr.vmem [resolvable:$true] %s10
  %13 = dma.vmem_to_smem %s11, 16, [#allocation4], [#allocation2]
  %14 = dma.done [#allocation2], 32
  %15 = sfence
  $region1: #{tpu_custom_call.1} parent=0
    #allocation5 [shape = 'u8[8192]{0}', space=vmem, size = 0x2000, scoped, tag = 'input window, operand 2']
    #allocation6 [shape = 's32[2]{0}', space=sflag, size = 0x8, scoped, tag = 'scoped memory for tpu_custom_call.1']
    #allocation7 [shape = 's32[2]{0}', space=sflag, size = 0x8, scoped, tag = 'scoped memory for tpu_custom_call.1']
    #allocation8 [shape = 'u8[8192]{0}', space=vmem, size = 0x2000, scoped, tag = 'output window, operand 0']
    %16 = vsyncpa [#allocation6], 0
    %s17 = scalar_lea.sflag [#allocation6], 1
    %18 = vsyncpa %s17, 0
    %19 = vsyncpa [#allocation7], 0
    %s20 = scalar_lea.sflag [#allocation7], 1
    %21 = vsyncpa %s20, 0
    loop: start=0, step=1, limit=6
    $region2: #{tpu_custom_call.1} parent=1 // loop_pre_header
      _
    $region3: #{tpu_custom_call.1} parent=1 // loop_header
      %s23 = sphi 0, %s27
      %p24 = scmp.ge.s32.totalorder %s23, 6
      %s30 = sphi 0, %s42
      %s31 = sphi 0, %s38
      %s32 = sphi 0, %s30
      %s33 = sphi 0, %s31
      %s34 = sphi 0, %s32
      %s35 = sphi 0, %s33
      %s47 = sphi 0, %s49
      %s50 = sphi 0, %s47
      %s51 = sphi 0, %s50
      %s67 = sphi 0, %s51
      %s75 = sphi 0, %s77
      %s78 = sphi 0, %s75
      %s79 = sphi 0, %s78
      %s95 = sphi 0, %s79
    $region4: #{tpu_custom_call.1} parent=1 // loop_header_branch
      %26 = sbr.rel (%p24) target = $region8
    $region5: #{tpu_custom_call.1} parent=1 // loop_body
      %s28 = ssub.s32 %s23, 1
      %s29 = ssub.s32 %s23, 2
      %s36 = sadd.s32 1, %s31
      %p37 = scmp.ge.s32.totalorder %s36, 1
      %s38 = scalar_select %p37, 0, %s36
      %s39 = sadd.s32 1, %s30
      %s40 = scalar_select %p37, %s39, %s30
      %p41 = scmp.ge.s32.totalorder %s40, 4
      %s42 = scalar_select %p41, 0, %s40
      %s43 = ssub.s32 %s30, %s42
      %s44 = ssub.s32 %s31, %s38
      %s45 = sor.u32 %s43, %s44
      %p46 = scmp.eq.s32.totalorder %s45, 0
      %s48 = sadd.s32 %s47, 1
      %s49 = scalar_select %p46, %s47, %s48
      %p52 = pneg %p46
      %p53 = scmp.eq.s32.totalorder %s23, 3
      %p54 = por %p52, %p53
      %p55 = scmp.ne.s32.totalorder %s47, %s50
      %p56 = scmp.eq.s32.totalorder %s23, 0
      %p57 = por %p55, %p56
      %p58 = scmp.ne.s32.totalorder %s47, %s50
      %p59 = scmp.eq.s32.totalorder %s28, 3
      %p60 = por %p58, %p59
      %p61 = scmp.ne.s32.totalorder %s50, %s51
      %p62 = scmp.eq.s32.totalorder %s28, 0
      %p63 = por %p61, %p62
      %p64 = scmp.ne.s32.totalorder %s50, %s51
      %p65 = scmp.eq.s32.totalorder %s29, 3
      %p66 = por %p64, %p65
      %p68 = scmp.ne.s32.totalorder %s51, %s67
      %p69 = scmp.eq.s32.totalorder %s29, 0
      %p70 = por %p68, %p69
      %s71 = ssub.s32 %s30, %s42
      %s72 = ssub.s32 %s31, %s38
      %s73 = sor.u32 %s71, %s72
      %p74 = scmp.eq.s32.totalorder %s73, 0
      %s76 = sadd.s32 %s75, 1
      %s77 = scalar_select %p74, %s75, %s76
      %p80 = pneg %p74
      %p81 = scmp.eq.s32.totalorder %s23, 3
      %p82 = por %p80, %p81
      %p83 = scmp.ne.s32.totalorder %s75, %s78
      %p84 = scmp.eq.s32.totalorder %s23, 0
      %p85 = por %p83, %p84
      %p86 = scmp.ne.s32.totalorder %s75, %s78
      %p87 = scmp.eq.s32.totalorder %s28, 3
      %p88 = por %p86, %p87
      %p89 = scmp.ne.s32.totalorder %s78, %s79
      %p90 = scmp.eq.s32.totalorder %s28, 0
      %p91 = por %p89, %p90
      %p92 = scmp.ne.s32.totalorder %s78, %s79
      %p93 = scmp.eq.s32.totalorder %s29, 3
      %p94 = por %p92, %p93
      %p96 = scmp.ne.s32.totalorder %s79, %s95
      %p97 = scmp.eq.s32.totalorder %s29, 0
      %p98 = por %p96, %p97
      %p99 = scmp.le.s32.totalorder 1, %s23
      %p100 = scmp.lt.s32.totalorder %s23, 5
      %p101 = pnand %p99, %p100
      %p102 = pneg %p101
      // Predicated region
      $region9: #{tpu_custom_call.1} parent=5 // pred_check
        _
      $region10: #{tpu_custom_call.1} parent=5 // pred_check_branch
        %104 = sbr.rel (%p101) target = $region12
      $region11: #{tpu_custom_call.1} parent=5 // pred_region
        %s105 = ssub.s32 %s23, 1
      $region12: #{tpu_custom_call.1} parent=5 // pred_fallthru
        _
      %p106 = scmp.lt.s32.totalorder %s23, 4
      // Predicated region
      $region13: #{tpu_custom_call.1} parent=5 // pred_check
        %p107 = pneg %p106
      $region14: #{tpu_custom_call.1} parent=5 // pred_check_branch
        %109 = sbr.rel (%p107) target = $region16
      $region15: #{tpu_custom_call.1} parent=5 // pred_region
        // Predicated region
        $region17: #{tpu_custom_call.1} parent=15 // pred_check
          %p110 = pneg %p57
        $region18: #{tpu_custom_call.1} parent=15 // pred_check_branch
          %112 = sbr.rel (%p110) target = $region20
        $region19: #{tpu_custom_call.1} parent=15 // pred_region
          %s113 = sand.u32 %s47, 1
          %s114 = scalar_lea.sflag [#allocation6], %s113
          %s115 = sand.u32 %s47, 1
          %s116 = smul.addr %s115, 8
          %s117 = scalar_lea.vmem [#allocation5], %s116
          %s118 = smul.u32 2, %s31
          %s120 = ssub.s32 128, 128
          %121 = vsyncadd %s114, %s120
          %s122 = smul.addr %s30, 2
          %s123 = sadd.s32 %s118, %s122
          %s124 = smul.addr %s123, 64
          %s125 = scalar_lea.hbm %s2, %s124
          %s127 = sshll.u32 %s117, 4
          %s128 = int_to_ptr.vmem [resolvable:$true] %s127
          %130 = dma.hbm_to_vmem [thread:$0]  %s125, 128, %s128, %s114
        $region20: #{tpu_custom_call.1} parent=15 // pred_fallthru
          _
      $region16: #{tpu_custom_call.1} parent=5 // pred_fallthru
        _
      %p131 = scmp.le.s32.totalorder 1, %s23
      %p132 = scmp.lt.s32.totalorder %s23, 5
      %p133 = pnand %p131, %p132
      %p134 = pneg %p133
      // Predicated region
      $region21: #{tpu_custom_call.1} parent=5 // pred_check
        _
      $region22: #{tpu_custom_call.1} parent=5 // pred_check_branch
        %136 = sbr.rel (%p133) target = $region24
      $region23: #{tpu_custom_call.1} parent=5 // pred_region
        %s137 = ssub.s32 %s23, 1
        %s138 = sand.u32 %s50, 1
        %s139 = scalar_lea.sflag [#allocation6], %s138
        %s140 = sand.u32 %s50, 1
        %s141 = smul.addr %s140, 8
        %s142 = scalar_lea.vmem [#allocation5], %s141
        // Predicated region
        $region25: #{tpu_custom_call.1} parent=23 // pred_check
          %p143 = pneg %p63
        $region26: #{tpu_custom_call.1} parent=23 // pred_check_branch
          %145 = sbr.rel (%p143) target = $region28
        $region27: #{tpu_custom_call.1} parent=23 // pred_region
          %146 = dma.done %s139, 128
        $region28: #{tpu_custom_call.1} parent=23 // pred_fallthru
          _
        %s147 = sand.u32 %s50, 1
        %s148 = scalar_lea.sflag [#allocation6], %s147
        %s149 = sand.u32 %s50, 1
        %s150 = smul.addr %s149, 8
        %s151 = scalar_lea.vmem [#allocation5], %s150
        %p152 = pneg %p63
        %p153 = pneg %p60
        %p154 = pneg %p91
        %p155 = pneg %p88
        %s156 = sand.u32 %s78, 1
        %s157 = scalar_lea.sflag [#allocation7], %s156
        %s158 = sand.u32 %s78, 1
        %s159 = smul.addr %s158, 8
        %s160 = scalar_lea.vmem [#allocation8], %s159
        %s161 = smul.u32 2, %s33
        %s162 = smul.u32 2, %s33
        %v163 = vld [vmem:[%s142] sm:$0xff]
        %v165 = vcombine.high %v163, %v163
        %vm167 = vcmask 1043456
        %v168 = vsel %vm167, %v163, 0.0
        %v169 = vrot.slane %v168, 4
        %v170 = vadd.f32 %v168, %v169
        %v171 = vrot.slane %v170, 2
        %v172 = vadd.f32 %v170, %v171
        %v173 = vrot.slane %v172, 1
        %v174 = vadd.f32 %v172, %v173
        %v175 = vsel %vm167, %v165, 0.0
        %v176 = vrot.slane %v175, 4
        %v177 = vadd.f32 %v175, %v176
        %v178 = vrot.slane %v177, 2
        %v179 = vadd.f32 %v177, %v178
        %v180 = vrot.slane %v179, 1
        %v181 = vadd.f32 %v179, %v180
        %v182 = vrcp.pop 4.0
        %v183 = vmul.f32 %v174, %v182
        %v184 = vmul.f32 %v181, %v182
        %v187 = vcombine.low %v183, %v184
        %v189 = vsub.f32 %v163, %v187
        %v190 = vmul.f32 %v189, %v189
        %v192 = vcombine.high %v190, %v190
        %v194 = vsel %vm167, %v190, 0.0
        %v195 = vrot.slane %v194, 4
        %v196 = vadd.f32 %v194, %v195
        %v197 = vrot.slane %v196, 2
        %v198 = vadd.f32 %v196, %v197
        %v199 = vrot.slane %v198, 1
        %v200 = vadd.f32 %v198, %v199
        %v201 = vsel %vm167, %v192, 0.0
        %v202 = vrot.slane %v201, 4
        %v203 = vadd.f32 %v201, %v202
        %v204 = vrot.slane %v203, 2
        %v205 = vadd.f32 %v203, %v204
        %v206 = vrot.slane %v205, 1
        %v207 = vadd.f32 %v205, %v206
        %v208 = vmul.f32 %v200, %v182
        %v209 = vmul.f32 %v207, %v182
        %v210 = vadd.f32 %v208, 1e-06
        %v211 = vadd.f32 %v209, 1e-06
        %v212 = vrsqrt.pop %v210
        %v213 = vrsqrt.pop %v211
        %s214 = sld [smem:[#allocation3 + %s32]]
        %s215 = sld [smem:[#allocation4 + %s32]]
        %v216 = vstv %s214
        %v217 = vmul.f32 %v212, %v216
        %v218 = vmul.f32 %v213, %v216
        %v221 = vcombine.low %v217, %v218
        %v223 = vmul.f32 %v189, %v221
        %v224 = vstv %s215
        %v225 = vadd.f32 %v223, %v224
        %226 = vst [vmem:[%s160] sm:$0xff] %v225
        %s227 = sand.u32 %s78, 1
        %s228 = scalar_lea.sflag [#allocation7], %s227
        %s229 = sand.u32 %s78, 1
        %s230 = smul.addr %s229, 8
        %s231 = scalar_lea.vmem [#allocation8], %s230
        // Predicated region
        $region29: #{tpu_custom_call.1} parent=23 // pred_check
          %p232 = pneg %p88
        $region30: #{tpu_custom_call.1} parent=23 // pred_check_branch
          %234 = sbr.rel (%p232) target = $region32
        $region31: #{tpu_custom_call.1} parent=23 // pred_region
          %s235 = smul.u32 2, %s33
          %s237 = ssub.s32 128, 128
          %238 = vsyncadd %s228, %s237
          %s239 = smul.addr %s32, 2
          %s240 = sadd.s32 %s235, %s239
          %s241 = smul.addr %s240, 64
          %s242 = scalar_lea.hbm %s3, %s241
          %s244 = sshll.u32 %s231, 4
          %s245 = int_to_ptr.vmem [resolvable:$true] %s244
          %247 = dma.vmem_to_hbm [thread:$0]  %s245, 128, %s242, %s228
        $region32: #{tpu_custom_call.1} parent=23 // pred_fallthru
          _
      $region24: #{tpu_custom_call.1} parent=5 // pred_fallthru
        _
      %p248 = scmp.le.s32.totalorder 2, %s23
      // Predicated region
      $region33: #{tpu_custom_call.1} parent=5 // pred_check
        %p249 = pneg %p248
      $region34: #{tpu_custom_call.1} parent=5 // pred_check_branch
        %251 = sbr.rel (%p249) target = $region36
      $region35: #{tpu_custom_call.1} parent=5 // pred_region
        %s252 = ssub.s32 %s23, 2
        // Predicated region
        $region37: #{tpu_custom_call.1} parent=35 // pred_check
          %p253 = pneg %p94
        $region38: #{tpu_custom_call.1} parent=35 // pred_check_branch
          %255 = sbr.rel (%p253) target = $region40
        $region39: #{tpu_custom_call.1} parent=35 // pred_region
          %s256 = sand.u32 %s79, 1
          %s257 = scalar_lea.sflag [#allocation7], %s256
          %s258 = sand.u32 %s79, 1
          %s259 = smul.addr %s258, 8
          %s260 = scalar_lea.vmem [#allocation8], %s259
          %261 = dma.done %s257, 128
        $region40: #{tpu_custom_call.1} parent=35 // pred_fallthru
          _
      $region36: #{tpu_custom_call.1} parent=5 // pred_fallthru
        _
    $region6: #{tpu_custom_call.1} parent=1 // loop_footer
      %s27 = sadd.s32 1, %s23
    $region7: #{tpu_custom_call.1} parent=1 // loop_footer_branch
      %22 = sbr.rel target = $region3
    $region8: #{tpu_custom_call.1} parent=1 // loop_exit
      _
    %262 = vsyncpa [#allocation6], 1
    %s263 = scalar_lea.sflag [#allocation6], 1
    %264 = vsyncpa %s263, 1
    %265 = vsyncpa [#allocation7], 1
    %s266 = scalar_lea.sflag [#allocation7], 1
    %267 = vsyncpa %s266, 1

</llo_original>
